<compile_context>
chip_gen: v5e
topology: v5e:2x2
jax: 0.10.0
libtpu: 0.0.40
codegen_flags: <defaults>
</compile_context>

<pallas_src>
import math
from functools import partial

import jax
import jax.numpy as jnp
from jax import lax
from jax.experimental import pallas as pl
from jax.experimental.pallas import tpu as pltpu


def _round_up(x, m):
    return ((x + m - 1) // m) * m


def _cdiv(a, b):
    return (a + b - 1) // b


def _sublane_multiple(dtype):
    itemsize = jnp.dtype(dtype).itemsize
    return max(8, 8 * (4 // max(itemsize, 1)))   # 8 f32 / 16 bf16 / 32 int8


# --------------------------------------------------------------------------
# Fast path: one block covers the full sequence; grid over batch only.
# --------------------------------------------------------------------------
def _sdpa_kernel_full(enc_ref, hid_ref, out_ref, *, inv_scale):
    enc = enc_ref[...]                                    # (TB, S, H) orig dtype
    hid = hid_ref[...].astype(enc.dtype)                  # (TB, H)
    # Batched (1 x H) @ (S x H)^T mat-vec on the MXU, f32 accumulation.
    scores = jnp.einsum("bkh,bsh->bks", hid[:, None, :], enc,
                        preferred_element_type=jnp.float32)[:, 0, :]
    scores = scores * inv_scale                           # (TB, S) f32
    m = jnp.max(scores, axis=-1, keepdims=True)
    e = jnp.exp(scores - m)
    denom = jnp.sum(e, axis=-1, keepdims=True)
    out_ref[...] = (e * pl.reciprocal(denom, approx=True)).astype(out_ref.dtype)


# --------------------------------------------------------------------------
# Long-sequence path: chunk S (last, "arbitrary" grid axis), stage scores in
# an f32 VMEM scratch, softmax + store at the last chunk.
# --------------------------------------------------------------------------
def _sdpa_kernel_chunked(enc_ref, hid_ref, out_ref, scores_ref, *,
                         inv_scale, seq_len, ts, lane_hint):
    s_idx = pl.program_id(1)

    enc = enc_ref[...]                                    # (TB, TS, H)
    hid = hid_ref[...].astype(enc.dtype)                  # (TB, H)
    chunk = jnp.einsum("bkh,bsh->bks", hid[:, None, :], enc,
                       preferred_element_type=jnp.float32)[:, 0, :]
    chunk = chunk * inv_scale                             # (TB, TS) f32

    # Mask columns that fall beyond the true sequence length (boundary chunk).
    col = lax.broadcasted_iota(jnp.int32, chunk.shape, 1) + s_idx * ts
    chunk = jnp.where(col < seq_len, chunk, -jnp.inf)

    start = pl.multiple_of(s_idx * ts, lane_hint)
    scores_ref[:, pl.ds(start, ts)] = chunk

    @pl.when(s_idx == pl.num_programs(1) - 1)
    def _():
        scores = scores_ref[...]                          # (TB, n_s*TS) f32
        m = jnp.max(scores, axis=-1, keepdims=True)
        e = jnp.exp(scores - m)
        denom = jnp.sum(e, axis=-1, keepdims=True)
        p = e * pl.reciprocal(denom, approx=True)
        out_ref[...] = p[:, : out_ref.shape[-1]].astype(out_ref.dtype)


def scaled_dot_product_attention(hidden, encoder_outputs):
    """hidden: (B, H) or (B, H, 1); encoder_outputs: (B, S, H) -> (B, S)."""
    if hidden.ndim == 2:
        hid = hidden
    elif hidden.ndim == 3:
        hid = hidden[:, :, 0]                             # (B, H, 1) -> (B, H)
    else:
        raise ValueError("hidden must be rank 2 or 3")

    enc = encoder_outputs                                 # keep original dtype
    B, S, H = enc.shape
    if hid.shape != (B, H):
        raise ValueError("hidden / encoder_outputs shape mismatch")

    inv_scale = 1.0 / math.sqrt(float(H))
    out_dtype = enc.dtype

    enc_item = jnp.dtype(enc.dtype).itemsize
    sub_enc = _sublane_multiple(enc.dtype)                # sublane pack of enc
    tb_unit = _sublane_multiple(out_dtype)                # sublane pack of out
    h_pad = _round_up(H, 128)                             # lane-padded H in VMEM

    # Per-buffer enc-tile target (Pallas double-buffers it); generation aware.
    try:
        vmem_bytes = getattr(pltpu.get_tpu_info(), "vmem_capacity_bytes",
                             64 * 1024 * 1024)
    except Exception:
        vmem_bytes = 64 * 1024 * 1024
    buf_target = (4 if vmem_bytes >= 100 * 1024 * 1024 else 2) * 1024 * 1024

    bytes_per_batch_row = _round_up(S, sub_enc) * h_pad * enc_item
    tb_min = min(B, tb_unit)

    if tb_min * bytes_per_batch_row <= buf_target:
        # -------- fast path: full sequence per block, grid over batch --------
        if B <= tb_unit:
            tb = B                                        # full dim -> exempt
        else:
            tb = max(tb_unit,
                     (buf_target // bytes_per_batch_row) // tb_unit * tb_unit)
            tb = min(tb, _round_up(B, tb_unit))
            # Keep >= 2 grid steps so both v7x TensorCores get work.
            tb = min(tb, _round_up(_cdiv(B, 2), tb_unit))

        kernel = partial(_sdpa_kernel_full, inv_scale=inv_scale)
        return pl.pallas_call(
            kernel,
            out_shape=jax.ShapeDtypeStruct((B, S), out_dtype),
            grid_spec=pltpu.PrefetchScalarGridSpec(
                num_scalar_prefetch=0,
                grid=(_cdiv(B, tb),),
                in_specs=[
                    pl.BlockSpec((tb, S, H), lambda b: (b, 0, 0)),
                    pl.BlockSpec((tb, H), lambda b: (b, 0)),
                ],
                out_specs=pl.BlockSpec((tb, S), lambda b: (b, 0)),
            ),
            compiler_params=pltpu.CompilerParams(
                dimension_semantics=("parallel",)),
        )(enc, hid)

    # -------- long-sequence path: chunk S with an f32 scores scratch ---------
    tb = min(B, tb_unit)
    ts = buf_target // max(tb * h_pad * enc_item, 1)
    if ts >= 128:
        ts = (ts // 128) * 128
    else:
        ts = max(sub_enc, (ts // sub_enc) * sub_enc)
    n_s = _cdiv(S, ts)
    lane_hint = 128 if ts % 128 == 0 else 8

    kernel = partial(_sdpa_kernel_chunked, inv_scale=inv_scale,
                     seq_len=S, ts=ts, lane_hint=lane_hint)
    return pl.pallas_call(
        kernel,
        out_shape=jax.ShapeDtypeStruct((B, S), out_dtype),
        grid_spec=pltpu.PrefetchScalarGridSpec(
            num_scalar_prefetch=0,
            grid=(_cdiv(B, tb), n_s),
            in_specs=[
                pl.BlockSpec((tb, ts, H), lambda b, s: (b, s, 0)),
                pl.BlockSpec((tb, H), lambda b, s: (b, 0)),
            ],
            out_specs=pl.BlockSpec((tb, S), lambda b, s: (b, 0)),
            scratch_shapes=[pltpu.VMEM((tb, n_s * ts), jnp.float32)],
        ),
        compiler_params=pltpu.CompilerParams(
            dimension_semantics=("parallel", "arbitrary")),
    )(enc, hid)


def _reference(hidden, encoder_outputs):
    if hidden.ndim == 2:
        hidden = hidden[:, :, None]
    scores = jnp.einsum("bsh,bho->bs",
                        encoder_outputs.astype(jnp.float32),
                        hidden.astype(jnp.float32))
    scale = jnp.sqrt(jnp.float32(encoder_outputs.shape[-1]))
    return jax.nn.softmax(scores / scale, axis=1)


if __name__ == "__main__":
    key = jax.random.PRNGKey(0)
    k1, k2 = jax.random.split(key)

    B, S, H = 2, 8, 32
    hidden = jax.random.normal(k1, (B, H), dtype=jnp.float32)
    encoder_outputs = jax.random.normal(k2, (B, S, H), dtype=jnp.float32)

    out = scaled_dot_product_attention(hidden, encoder_outputs)
    out = jax.block_until_ready(out)

    ref = _reference(hidden, encoder_outputs)
    assert out.shape == (B, S)
    # approx reciprocal in the epilogue -> slightly looser tolerance.
    assert jnp.allclose(out.astype(jnp.float32), ref, atol=2e-3, rtol=2e-3), \
        "mismatch vs reference"

    print("KERNEL_OK")
</pallas_src>

<mosaic_0001>
module attributes {stable_mosaic.version = 11 : i64} {
  func.func @_sdpa_kernel_full(%arg0: i32, %arg1: memref<2x8x32xf32, #tpu.memory_space<vmem>>, %arg2: memref<2x32xf32, #tpu.memory_space<vmem>>, %arg3: memref<2x8xf32, #tpu.memory_space<vmem>>) attributes {dimension_semantics = [#tpu.dimension_semantics<parallel>], iteration_bounds = array<i64: 1>, scalar_prefetch = 0 : i64, scratch_operands = 0 : i64, tpu.core_type = #tpu.core_type<tc>, window_params = [{transform_indices = @transform_0, window_bounds = array<i64: 2, 8, 32>}, {transform_indices = @transform_1, window_bounds = array<i64: 2, 32>}, {transform_indices = @transform_2, window_bounds = array<i64: 2, 8>}]} {
    %c0 = arith.constant 0 : index
    %c0_0 = arith.constant 0 : index
    %c0_1 = arith.constant 0 : index
    %0 = vector.load %arg1[%c0, %c0_0, %c0_1] : memref<2x8x32xf32, #tpu.memory_space<vmem>>, vector<2x8x32xf32>
    %c0_2 = arith.constant 0 : index
    %c0_3 = arith.constant 0 : index
    %1 = vector.load %arg2[%c0_2, %c0_3] : memref<2x32xf32, #tpu.memory_space<vmem>>, vector<2x32xf32>
    %2 = vector.shape_cast %1 : vector<2x32xf32> to vector<2x1x32xf32>
    "tpu.trace_start"() <{level = 10 : i32, message = "bkh,bsh->bks"}> : () -> ()
    %cst = arith.constant dense<0.000000e+00> : vector<2x1x8xf32>
    %3 = tpu.matmul %2, %0, %cst {dimension_numbers = #tpu.dot_dimension_numbers<[2], [2], [1], [1], [0, 0, 0, 1, 1, 1], [0], [0]>} : vector<2x1x32xf32>, vector<2x8x32xf32>, vector<2x1x8xf32> -> vector<2x1x8xf32>
    "tpu.trace_stop"() : () -> ()
    %4 = vector.shape_cast %3 : vector<2x1x8xf32> to vector<2x8xf32>
    %cst_4 = arith.constant 0.176776692 : f32
    %5 = vector.broadcast %cst_4 : f32 to vector<2x8xf32>
    %6 = arith.mulf %4, %5 : vector<2x8xf32>
    %cst_5 = arith.constant dense<0xFF800000> : vector<2xf32>
    %7 = vector.multi_reduction <maximumf>, %6, %cst_5 [1] : vector<2x8xf32> to vector<2xf32>
    %8 = vector.shape_cast %7 : vector<2xf32> to vector<2x1xf32>
    %9 = vector.broadcast %8 : vector<2x1xf32> to vector<2x8xf32>
    %10 = arith.subf %6, %9 : vector<2x8xf32>
    %11 = math.exp %10 : vector<2x8xf32>
    %cst_6 = arith.constant dense<0.000000e+00> : vector<2xf32>
    %12 = vector.multi_reduction <add>, %11, %cst_6 [1] : vector<2x8xf32> to vector<2xf32>
    %13 = vector.shape_cast %12 : vector<2xf32> to vector<2x1xf32>
    %14 = tpu.reciprocal %13 {approx = true} : vector<2x1xf32> -> vector<2x1xf32>
    %15 = vector.broadcast %14 : vector<2x1xf32> to vector<2x8xf32>
    %16 = arith.mulf %11, %15 : vector<2x8xf32>
    %c0_7 = arith.constant 0 : index
    %c0_8 = arith.constant 0 : index
    %17 = vector.load %arg3[%c0_7, %c0_8] : memref<2x8xf32, #tpu.memory_space<vmem>>, vector<2x8xf32>
    tpu.vector_store %arg3[%c0_7, %c0_8], %16 {strides = array<i32>} : memref<2x8xf32, #tpu.memory_space<vmem>>, vector<2x8xf32>,
    return
  }
  func.func @transform_0(%arg0: i32) -> (i32, i32, i32) {
    %c0_i32 = arith.constant 0 : i32
    %c0_i32_0 = arith.constant 0 : i32
    %c0_i32_1 = arith.constant 0 : i32
    return %arg0, %c0_i32, %c0_i32_0 : i32, i32, i32
  }
  func.func @transform_1(%arg0: i32) -> (i32, i32) {
    %c0_i32 = arith.constant 0 : i32
    %c0_i32_0 = arith.constant 0 : i32
    return %arg0, %c0_i32 : i32, i32
  }
  func.func @transform_2(%arg0: i32) -> (i32, i32) {
    %c0_i32 = arith.constant 0 : i32
    %c0_i32_0 = arith.constant 0 : i32
    return %arg0, %c0_i32 : i32, i32
  }
}

</mosaic_0001>

<llo_original>
// kernel: tpu_custom_call.1
$region0: #{tpu_custom_call.1}
  #allocation0 [shape = 'u32[]', space=smem, size = 0x4, offset = 0x4, fixed_abs, tag = 'smem constant byte address 0x4 - core index']
  #allocation1 [shape = 'u32[72,128]{1,0:T(1,128)}', space=vmem, size = 0x9000, scoped, tag = 'internal scratch']
  %s0 = inlined_call_operand.hbm [shape: f32[2,8,32], index: 0, kind: input, shape index: {}]
  %s1 = inlined_call_operand.hbm [shape: f32[2,32], index: 1, kind: input, shape index: {}]
  %s2 = inlined_call_operand.hbm [shape: f32[2,8], index: 2, kind: output, shape index: {}]
  %s3 = sld [smem:[#allocation0]]
  $region26: #{tpu_custom_call.1} parent=0
    _
  %s5 = ssub.s32 1, %s3
  %s6 = scalar_select 0, %s5, %s3
  $region1: #{tpu_custom_call.1} parent=0
    #allocation2 [shape = 'u8[8192]{0}', space=vmem, size = 0x2000, scoped, tag = 'input window, operand 0, single buffered']
    #allocation3 [shape = 's32[1]{0}', space=sflag, size = 0x4, scoped, tag = 'scoped memory for tpu_custom_call.1']
    #allocation4 [shape = 's32[1]{0}', space=sflag, size = 0x4, scoped, tag = 'scoped memory for tpu_custom_call.1']
    #allocation5 [shape = 'u8[1024]{0}', space=vmem, size = 0x400, scoped, tag = 'input window, operand 1, single buffered']
    #allocation6 [shape = 's32[1]{0}', space=sflag, size = 0x4, scoped, tag = 'scoped memory for tpu_custom_call.1']
    #allocation7 [shape = 'u8[1024]{0}', space=vmem, size = 0x400, scoped, tag = 'output window, operand 0, single buffered']
    %7 = vsyncpa [#allocation3], 0
    %8 = vsyncpa [#allocation6], 0
    %9 = vsyncpa [#allocation4], 0
    // Predicated region
    $region2: #{tpu_custom_call.1} parent=1 // pred_check
      _
    $region3: #{tpu_custom_call.1} parent=1 // pred_check_branch
      %11 = sbr.rel (0) target = $region5
    $region4: #{tpu_custom_call.1} parent=1 // pred_region
      %13 = vsyncadd [#allocation3], 0
      %s14 = sshll.u32 %s0, 4
      %s15 = int_to_ptr.hbm [resolvable:$true] %s14
      %s16 = sshll.u32 [#allocation2], 4
      %s17 = int_to_ptr.vmem [resolvable:$true] %s16
      %22 = dma.hbm_to_vmem [thread:$0]  %s15, 256, %s17, [#allocation3], 128, 128, 8
    $region5: #{tpu_custom_call.1} parent=1 // pred_fallthru
      _
    // Predicated region
    $region6: #{tpu_custom_call.1} parent=1 // pred_check
      _
    $region7: #{tpu_custom_call.1} parent=1 // pred_check_branch
      %24 = sbr.rel (0) target = $region9
    $region8: #{tpu_custom_call.1} parent=1 // pred_region
      %26 = vsyncadd [#allocation6], 0
      %s28 = sshll.u32 %s1, 4
      %s29 = int_to_ptr.hbm [resolvable:$true] %s28
      %s30 = sshll.u32 [#allocation5], 4
      %s31 = int_to_ptr.vmem [resolvable:$true] %s30
      %33 = dma.hbm_to_vmem [thread:$0]  %s29, 32, %s31, [#allocation6]
    $region9: #{tpu_custom_call.1} parent=1 // pred_fallthru
      _
    // Predicated region
    $region10: #{tpu_custom_call.1} parent=1 // pred_check
      _
    $region11: #{tpu_custom_call.1} parent=1 // pred_check_branch
      %35 = sbr.rel (0) target = $region13
    $region12: #{tpu_custom_call.1} parent=1 // pred_region
      %37 = dma.done [#allocation3], 256
    $region13: #{tpu_custom_call.1} parent=1 // pred_fallthru
      _
    // Predicated region
    $region14: #{tpu_custom_call.1} parent=1 // pred_check
      _
    $region15: #{tpu_custom_call.1} parent=1 // pred_check_branch
      %39 = sbr.rel (0) target = $region17
    $region16: #{tpu_custom_call.1} parent=1 // pred_region
      %41 = dma.done [#allocation6], 32
    $region17: #{tpu_custom_call.1} parent=1 // pred_fallthru
      _
    %v42 = vld [vmem:[#allocation2] sm:$0xff]
    %v43 = vld [vmem:[#allocation2 + $0x8] sm:$0xff]
    %v44 = vld [vmem:[#allocation5] sm:$0x3]
    %v46 = vrot.slane %v44, 1
    %vm47 = vcmask 261120
    %v48 = vsel %vm47, %v44, 0
    %v51 = vsel %vm47, %v42, 0
    %53 = vmatpush.xpose.msra.mxu0 0.0
    %54 = vmatpush.xpose.msra.mxu0 0.0
    %55 = vmatpush.xpose.msra.mxu0 0.0
    %56 = vmatpush.xpose.msra.mxu0 0.0
    %57 = vmatpush.xpose.msra.mxu0 0.0
    %58 = vmatpush.xpose.msra.mxu0 0.0
    %59 = vmatpush.xpose.msra.mxu0 0.0
    %60 = vmatpush.xpose.msra.mxu0 0.0
    %61 = vmatpush.xpose.msra.mxu0 0.0
    %62 = vmatpush.xpose.msra.mxu0 0.0
    %63 = vmatpush.xpose.msra.mxu0 0.0
    %64 = vmatpush.xpose.msra.mxu0 0.0
    %65 = vmatpush.xpose.msra.mxu0 0.0
    %66 = vmatpush.xpose.msra.mxu0 0.0
    %67 = vmatpush.xpose.msra.mxu0 0.0
    %68 = vmatpush.xpose.msra.mxu0 %v51
    %69 = vmatmul.f32.gmra.mxu0 %v48
    %v70 = vpop.f32.mrf.mxu0
    %v71 = vadd.f32 0.0, %v70
    %72 = vdwg.mxu0
    %v73 = vsel %vm47, %v46, 0
    %v76 = vsel %vm47, %v43, 0
    %78 = vmatpush.xpose.msra.mxu0 0.0
    %79 = vmatpush.xpose.msra.mxu0 0.0
    %80 = vmatpush.xpose.msra.mxu0 0.0
    %81 = vmatpush.xpose.msra.mxu0 0.0
    %82 = vmatpush.xpose.msra.mxu0 0.0
    %83 = vmatpush.xpose.msra.mxu0 0.0
    %84 = vmatpush.xpose.msra.mxu0 0.0
    %85 = vmatpush.xpose.msra.mxu0 0.0
    %86 = vmatpush.xpose.msra.mxu0 0.0
    %87 = vmatpush.xpose.msra.mxu0 0.0
    %88 = vmatpush.xpose.msra.mxu0 0.0
    %89 = vmatpush.xpose.msra.mxu0 0.0
    %90 = vmatpush.xpose.msra.mxu0 0.0
    %91 = vmatpush.xpose.msra.mxu0 0.0
    %92 = vmatpush.xpose.msra.mxu0 0.0
    %93 = vmatpush.xpose.msra.mxu0 %v76
    %94 = vmatmul.f32.gmra.mxu0 %v73
    %v95 = vpop.f32.mrf.mxu0
    %v96 = vadd.f32 0.0, %v95
    %97 = vdwg.mxu0
    %v98 = vmul.f32 %v71, 0.17677669
    %v99 = vmul.f32 %v96, 0.17677669
    %v102 = vrot.slane %v99, 7
    %vm103 = vcmask 1041409
    %v104 = vsel %vm103, %v102, %v98
    %vm106 = vcmask 58368
    %v107 = vsel %vm106, %v104, -inf
    %108 = vmax.xlane.f32.xlu0 %v107
    %v109 = vpop.xlane.xlu0 %108
    %v111 = vrot.slane %v109, 1
    %v114 = vsub.f32 %v98, %v109
    %v115 = vsub.f32 %v99, %v111
    %v116 = vmul.f32 %v114, 1.442695
    %v117 = vpow.pop %v116
    %v118 = vmul.f32 %v115, 1.442695
    %v119 = vpow.pop %v118
    %v122 = vrot.slane %v119, 7
    %v123 = vsel %vm103, %v122, %v117
    %v125 = vsel %vm106, %v123, 0.0
    %126 = vadd.xlane.f32.xlu0 %v125
    %v127 = vpop.xlane.xlu0 %126
    %v128 = vrcp.pop %v127
    %v130 = vrot.slane %v128, 1
    %v133 = vmul.f32 %v117, %v128
    %v134 = vmul.f32 %v119, %v130
    %v137 = vrot.slane %v134, 7
    %v138 = vsel %vm103, %v137, %v133
    %140 = vst.msk [vmem:[#allocation7] sm:$0x3] %vm106, %v138
    // Predicated region
    $region18: #{tpu_custom_call.1} parent=1 // pred_check
      _
    $region19: #{tpu_custom_call.1} parent=1 // pred_check_branch
      %142 = sbr.rel (0) target = $region21
    $region20: #{tpu_custom_call.1} parent=1 // pred_region
      %144 = vsyncadd [#allocation4], 0
      %s146 = sshll.u32 [#allocation7], 4
      %s147 = int_to_ptr.vmem [resolvable:$true] %s146
      %s148 = sshll.u32 %s2, 4
      %s149 = int_to_ptr.hbm [resolvable:$true] %s148
      %151 = dma.vmem_to_hbm [thread:$0]  %s147, 32, %s149, [#allocation4]
    $region21: #{tpu_custom_call.1} parent=1 // pred_fallthru
      _
    // Predicated region
    $region22: #{tpu_custom_call.1} parent=1 // pred_check
      _
    $region23: #{tpu_custom_call.1} parent=1 // pred_check_branch
      %153 = sbr.rel (0) target = $region25
    $region24: #{tpu_custom_call.1} parent=1 // pred_region
      %155 = dma.done [#allocation4], 32
    $region25: #{tpu_custom_call.1} parent=1 // pred_fallthru
      _
    %156 = vsyncpa [#allocation3], 1
    %157 = vsyncpa [#allocation6], 1
    %158 = vsyncpa [#allocation4], 1

</llo_original>
